<compile_context>
chip_gen: v7x
topology: tpu7x:2x2x1
jax: 0.10.0
libtpu: 0.0.40
codegen_flags: <defaults>
</compile_context>

<pallas_src>
import functools

import jax
import jax.numpy as jnp
from jax.experimental import pallas as pl
from jax.experimental.pallas import tpu as pltpu

_SUBLANE = 8
_HIDDEN = 64  # fixed by the module: nn.Linear(input_shape, 64)


def _round_up(x, m):
    return ((x + m - 1) // m) * m


def _extractor_kernel(x_ref, w1_ref, b1_ref, w2_ref, b2_ref, out_ref):
    # fc1 + ReLU  (bf16 MXU operands, f32 accumulation)
    h = jnp.dot(
        x_ref[...].astype(jnp.bfloat16),
        w1_ref[...].astype(jnp.bfloat16),
        preferred_element_type=jnp.float32,
    )
    h = jnp.maximum(h + b1_ref[...], 0.0)
    # fc2 + ReLU
    y = jnp.dot(
        h.astype(jnp.bfloat16),
        w2_ref[...].astype(jnp.bfloat16),
        preferred_element_type=jnp.float32,
    )
    y = jnp.maximum(y + b2_ref[...], 0.0)
    out_ref[...] = y.astype(out_ref.dtype)


def _choose_tile_b(B, K, F, tile_b, vmem_budget_bytes=24 * 1024 * 1024):
    """Pick a sublane-aligned batch tile that fits VMEM on every generation."""
    B8 = _round_up(B, _SUBLANE)
    if B8 <= tile_b:
        if B8 >= 2 * _SUBLANE:
            # Small batch: split into 2 tiles so both v7x TensorCores get work.
            t = _round_up((B + 1) // 2, _SUBLANE)
        else:
            t = B8
    else:
        t = tile_b

    def footprint(t):
        # double-buffered activation/output tiles + double-buffered resident
        # weights/biases + in-kernel f32 intermediates.
        return 4 * (
            2 * t * (K + F)
            + 2 * (K * _HIDDEN + _HIDDEN + _HIDDEN * F + F)
            + t * (_HIDDEN + F)
        )

    while t > _SUBLANE and footprint(t) > vmem_budget_bytes:
        t = _round_up(t // 2, _SUBLANE)
    return max(t, _SUBLANE)


@functools.partial(jax.jit, static_argnames=("tile_b",))
def extractor_forward(inputs, params, *, tile_b=512):
    """features = relu(fc2(relu(fc1(inputs)))).  inputs: (B, input_shape)."""
    B, K = inputs.shape
    H = params["w1"].shape[1]
    F = params["w2"].shape[1]

    TILE_B = _choose_tile_b(B, K, F, tile_b)
    grid = (pl.cdiv(B, TILE_B),)

    w1 = params["w1"].astype(jnp.float32)
    w2 = params["w2"].astype(jnp.float32)
    b1 = params["b1"].reshape(1, H).astype(jnp.float32)
    b2 = params["b2"].reshape(1, F).astype(jnp.float32)

    cost = pl.CostEstimate(
        flops=2 * B * K * H + 2 * B * H * F + B * (H + F),
        transcendentals=0,
        bytes_accessed=4 * (B * K + K * H + H + H * F + F + B * F),
    )

    out = pl.pallas_call(
        _extractor_kernel,
        out_shape=jax.ShapeDtypeStruct((B, F), jnp.float32),
        grid=grid,
        in_specs=[
            # activations: tiled on batch; last dim = full K (no HBM padding)
            pl.BlockSpec((TILE_B, K), lambda i: (i, 0)),
            # weights/biases: constant index_map -> VMEM-resident across tiles
            pl.BlockSpec((K, H), lambda i: (0, 0)),
            pl.BlockSpec((1, H), lambda i: (0, 0)),
            pl.BlockSpec((H, F), lambda i: (0, 0)),
            pl.BlockSpec((1, F), lambda i: (0, 0)),
        ],
        out_specs=pl.BlockSpec((TILE_B, F), lambda i: (i, 0)),
        compiler_params=pltpu.CompilerParams(
            dimension_semantics=("parallel",),
        ),
        cost_estimate=cost,
    )(inputs, w1, b1, w2, b2)

    return out


def init_params(key, input_shape, f_size, hidden=_HIDDEN):
    """Deterministic synthetic params. Weights stored transposed: (in, out)."""
    ks = jax.random.split(key, 4)
    s = 0.1
    return {
        "w1": s * jax.random.normal(ks[0], (input_shape, hidden), jnp.float32),
        "b1": s * jax.random.normal(ks[1], (hidden,), jnp.float32),
        "w2": s * jax.random.normal(ks[2], (hidden, f_size), jnp.float32),
        "b2": s * jax.random.normal(ks[3], (f_size,), jnp.float32),
    }


def _reference_forward(inputs, params):
    """Pure-JAX f32 reference reproducing the PyTorch module."""
    x = jax.nn.relu(inputs @ params["w1"] + params["b1"])
    x = jax.nn.relu(x @ params["w2"] + params["b2"])
    return x


if __name__ == "__main__":
    # Small shapes consistent with the module's forward:
    #   inputs: (batch, input_shape); fc1 hidden is fixed at 64 by the module.
    batch = 8
    input_shape = 32
    f_size = 16

    key = jax.random.PRNGKey(0)
    k_x, k_p = jax.random.split(key, 2)

    inputs = jax.random.normal(k_x, (batch, input_shape), jnp.float32)
    params = init_params(k_p, input_shape, f_size)

    feat = extractor_forward(inputs, params)
    jax.block_until_ready(feat)

    feat_ref = _reference_forward(inputs, params)
    assert feat.shape == (batch, f_size)
    # bf16 MXU operands with f32 accumulation -> compare at relaxed tolerance.
    err = jnp.max(jnp.abs(feat - feat_ref))
    assert jnp.allclose(feat, feat_ref, atol=2e-2, rtol=2e-2), f"max abs err {err}"

    print("KERNEL_OK")
</pallas_src>

<mosaic_0001>
module attributes {stable_mosaic.version = 11 : i64} {
  func.func @_extractor_kernel(%arg0: i32, %arg1: memref<8x32xf32, #tpu.memory_space<vmem>>, %arg2: memref<32x64xf32, #tpu.memory_space<vmem>>, %arg3: memref<1x64xf32, #tpu.memory_space<vmem>>, %arg4: memref<64x16xf32, #tpu.memory_space<vmem>>, %arg5: memref<1x16xf32, #tpu.memory_space<vmem>>, %arg6: memref<8x16xf32, #tpu.memory_space<vmem>>) attributes {dimension_semantics = [#tpu.dimension_semantics<parallel>], iteration_bounds = array<i64: 1>, scalar_prefetch = 0 : i64, scratch_operands = 0 : i64, tpu.core_type = #tpu.core_type<tc>, window_params = [{transform_indices = @transform_0, window_bounds = array<i64: 8, 32>}, {pipeline_mode = #tpu.pipeline_mode<synchronous>, transform_indices = @transform_1, window_bounds = array<i64: 32, 64>}, {pipeline_mode = #tpu.pipeline_mode<synchronous>, transform_indices = @transform_2, window_bounds = array<i64: 1, 64>}, {pipeline_mode = #tpu.pipeline_mode<synchronous>, transform_indices = @transform_3, window_bounds = array<i64: 64, 16>}, {pipeline_mode = #tpu.pipeline_mode<synchronous>, transform_indices = @transform_4, window_bounds = array<i64: 1, 16>}, {transform_indices = @transform_5, window_bounds = array<i64: 8, 16>}]} {
    %c0 = arith.constant 0 : index
    %c0_0 = arith.constant 0 : index
    %0 = vector.load %arg1[%c0, %c0_0] : memref<8x32xf32, #tpu.memory_space<vmem>>, vector<8x32xf32>
    %1 = arith.truncf %0 : vector<8x32xf32> to vector<8x32xbf16>
    %c0_1 = arith.constant 0 : index
    %c0_2 = arith.constant 0 : index
    %2 = vector.load %arg2[%c0_1, %c0_2] : memref<32x64xf32, #tpu.memory_space<vmem>>, vector<32x64xf32>
    %3 = arith.truncf %2 : vector<32x64xf32> to vector<32x64xbf16>
    %cst = arith.constant dense<0.000000e+00> : vector<8x64xf32>
    %4 = tpu.matmul %1, %3, %cst {dimension_numbers = #tpu.dot_dimension_numbers<[1], [0], [0], [1], [0, 0, 1, 1], [], []>} : vector<8x32xbf16>, vector<32x64xbf16>, vector<8x64xf32> -> vector<8x64xf32>
    %c0_3 = arith.constant 0 : index
    %c0_4 = arith.constant 0 : index
    %5 = vector.load %arg3[%c0_3, %c0_4] : memref<1x64xf32, #tpu.memory_space<vmem>>, vector<1x64xf32>
    %6 = vector.broadcast %5 : vector<1x64xf32> to vector<8x64xf32>
    %7 = arith.addf %4, %6 : vector<8x64xf32>
    %cst_5 = arith.constant 0.000000e+00 : f32
    %8 = vector.broadcast %cst_5 : f32 to vector<8x64xf32>
    %9 = arith.maximumf %7, %8 : vector<8x64xf32>
    %10 = arith.truncf %9 : vector<8x64xf32> to vector<8x64xbf16>
    %c0_6 = arith.constant 0 : index
    %c0_7 = arith.constant 0 : index
    %11 = vector.load %arg4[%c0_6, %c0_7] : memref<64x16xf32, #tpu.memory_space<vmem>>, vector<64x16xf32>
    %12 = arith.truncf %11 : vector<64x16xf32> to vector<64x16xbf16>
    %cst_8 = arith.constant dense<0.000000e+00> : vector<8x16xf32>
    %13 = tpu.matmul %10, %12, %cst_8 {dimension_numbers = #tpu.dot_dimension_numbers<[1], [0], [0], [1], [0, 0, 1, 1], [], []>} : vector<8x64xbf16>, vector<64x16xbf16>, vector<8x16xf32> -> vector<8x16xf32>
    %c0_9 = arith.constant 0 : index
    %c0_10 = arith.constant 0 : index
    %14 = vector.load %arg5[%c0_9, %c0_10] : memref<1x16xf32, #tpu.memory_space<vmem>>, vector<1x16xf32>
    %15 = vector.broadcast %14 : vector<1x16xf32> to vector<8x16xf32>
    %16 = arith.addf %13, %15 : vector<8x16xf32>
    %cst_11 = arith.constant 0.000000e+00 : f32
    %17 = vector.broadcast %cst_11 : f32 to vector<8x16xf32>
    %18 = arith.maximumf %16, %17 : vector<8x16xf32>
    %c0_12 = arith.constant 0 : index
    %c0_13 = arith.constant 0 : index
    %19 = vector.load %arg6[%c0_12, %c0_13] : memref<8x16xf32, #tpu.memory_space<vmem>>, vector<8x16xf32>
    tpu.vector_store %arg6[%c0_12, %c0_13], %18 {strides = array<i32>} : memref<8x16xf32, #tpu.memory_space<vmem>>, vector<8x16xf32>,
    return
  }
  func.func @transform_0(%arg0: i32) -> (i32, i32) {
    %c0_i32 = arith.constant 0 : i32
    %c0_i32_0 = arith.constant 0 : i32
    return %arg0, %c0_i32 : i32, i32
  }
  func.func @transform_1(%arg0: i32) -> (i32, i32) {
    %c0_i32 = arith.constant 0 : i32
    %c0_i32_0 = arith.constant 0 : i32
    %c0_i32_1 = arith.constant 0 : i32
    return %c0_i32, %c0_i32_0 : i32, i32
  }
  func.func @transform_2(%arg0: i32) -> (i32, i32) {
    %c0_i32 = arith.constant 0 : i32
    %c0_i32_0 = arith.constant 0 : i32
    %c0_i32_1 = arith.constant 0 : i32
    return %c0_i32, %c0_i32_0 : i32, i32
  }
  func.func @transform_3(%arg0: i32) -> (i32, i32) {
    %c0_i32 = arith.constant 0 : i32
    %c0_i32_0 = arith.constant 0 : i32
    %c0_i32_1 = arith.constant 0 : i32
    return %c0_i32, %c0_i32_0 : i32, i32
  }
  func.func @transform_4(%arg0: i32) -> (i32, i32) {
    %c0_i32 = arith.constant 0 : i32
    %c0_i32_0 = arith.constant 0 : i32
    %c0_i32_1 = arith.constant 0 : i32
    return %c0_i32, %c0_i32_0 : i32, i32
  }
  func.func @transform_5(%arg0: i32) -> (i32, i32) {
    %c0_i32 = arith.constant 0 : i32
    %c0_i32_0 = arith.constant 0 : i32
    return %arg0, %c0_i32 : i32, i32
  }
}

</mosaic_0001>

<llo_original>
// kernel: extractor_forward.1
$region0: #{extractor_forward.1}
  #allocation0 [shape = 'u32[]', space=smem, size = 0x4, offset = 0x4, fixed_abs, tag = 'smem constant byte address 0x4 - core index']
  #allocation1 [shape = 'u32[144,128]{1,0:T(1,128)}', space=vmem, size = 0x12000, scoped, tag = 'internal scratch']
  %s0 = inlined_call_operand.vmem [shape: f32[8,32], index: 0, kind: input, shape index: {}]
  %s1 = inlined_call_operand.vmem [shape: f32[32,64], index: 1, kind: input, shape index: {}]
  %s2 = inlined_call_operand.vmem [shape: f32[1,64], index: 2, kind: input, shape index: {}]
  %s3 = inlined_call_operand.vmem [shape: f32[64,16], index: 3, kind: input, shape index: {}]
  %s4 = inlined_call_operand.vmem [shape: f32[1,16], index: 4, kind: input, shape index: {}]
  %s5 = inlined_call_operand.hbm [shape: f32[8,16], index: 5, kind: output, shape index: {}]
  %s6 = sld [smem:[#allocation0]]
  $region30: #{extractor_forward.1} parent=0
    _
  %s8 = ssub.s32 1, %s6
  %s9 = scalar_select 0, %s8, %s6
  $region1: #{extractor_forward.1} parent=0
    #allocation2 [shape = 'u8[4096]{0}', space=vmem, size = 0x1000, scoped, tag = 'output window, operand 0, single buffered']
    #allocation3 [shape = 's32[1]{0}', space=sflag, size = 0x4, scoped, tag = 'scoped memory for extractor_forward.1']
    %10 = vsyncpa [#allocation3], 0
    // Predicated region
    $region2: #{extractor_forward.1} parent=1 // pred_check
      _
    $region3: #{extractor_forward.1} parent=1 // pred_check_branch
      %12 = sbr.rel (0) target = $region5
    $region4: #{extractor_forward.1} parent=1 // pred_region
      _
    $region5: #{extractor_forward.1} parent=1 // pred_fallthru
      _
    // Predicated region
    $region6: #{extractor_forward.1} parent=1 // pred_check
      _
    $region7: #{extractor_forward.1} parent=1 // pred_check_branch
      %14 = sbr.rel (0) target = $region9
    $region8: #{extractor_forward.1} parent=1 // pred_region
      _
    $region9: #{extractor_forward.1} parent=1 // pred_fallthru
      _
    // Predicated region
    $region10: #{extractor_forward.1} parent=1 // pred_check
      _
    $region11: #{extractor_forward.1} parent=1 // pred_check_branch
      %16 = sbr.rel (0) target = $region13
    $region12: #{extractor_forward.1} parent=1 // pred_region
      _
    $region13: #{extractor_forward.1} parent=1 // pred_fallthru
      _
    // Predicated region
    $region14: #{extractor_forward.1} parent=1 // pred_check
      _
    $region15: #{extractor_forward.1} parent=1 // pred_check_branch
      %18 = sbr.rel (0) target = $region17
    $region16: #{extractor_forward.1} parent=1 // pred_region
      _
    $region17: #{extractor_forward.1} parent=1 // pred_fallthru
      _
    // Predicated region
    $region18: #{extractor_forward.1} parent=1 // pred_check
      _
    $region19: #{extractor_forward.1} parent=1 // pred_check_branch
      %20 = sbr.rel (0) target = $region21
    $region20: #{extractor_forward.1} parent=1 // pred_region
      _
    $region21: #{extractor_forward.1} parent=1 // pred_fallthru
      _
    %v22 = vld [vmem:[%s0] sm:$0xff]
    %v23 = vpack.c.bf16 %v22, %v22
    %v24 = vld [vmem:[%s1] sm:$0xff]
    %v25 = vld [vmem:[%s1 + $0x8] sm:$0xff]
    %v26 = vld [vmem:[%s1 + $0x10] sm:$0xff]
    %v27 = vld [vmem:[%s1 + $0x18] sm:$0xff]
    %v28 = vpack.c.bf16 %v25, %v24
    %v29 = vpack.c.bf16 %v27, %v26
    %v30 = vld [vmem:[%s2] sm:$0x1]
    %v32 = vlaneseq
    %v33 = vshrl.u32 %v32, 7
    %v34 = vsub.s32 0, %v33
    %v35 = vrot.slane %v30, %v34
    %vm37 = vcmask 261120
    %v39 = vsel %vm37, %v23, 0
    %41 = vmatprep.subr.bf16.mxu0 0
    %42 = vmatpush1.bf16.msra.mxu0 %v28
    %43 = vmatprep.subr.bf16.mxu0 0
    %44 = vmatpush1.bf16.msra.mxu0 %v29
    %45 = vmatprep.subr.bf16.mxu0 0
    %46 = vmatpush1.bf16.msra.mxu0 0
    %47 = vmatprep.subr.bf16.mxu0 0
    %48 = vmatpush1.bf16.msra.mxu0 0
    %49 = vmatprep.subr.bf16.mxu0 0
    %50 = vmatpush1.bf16.msra.mxu0 0
    %51 = vmatprep.subr.bf16.mxu0 0
    %52 = vmatpush1.bf16.msra.mxu0 0
    %53 = vmatprep.subr.bf16.mxu0 0
    %54 = vmatpush1.bf16.msra.mxu0 0
    %55 = vmatprep.subr.bf16.mxu0 0
    %56 = vmatpush1.bf16.msra.mxu0 0
    %57 = vmatprep.subr.bf16.mxu0 0
    %58 = vmatpush1.bf16.msra.mxu0 0
    %59 = vmatprep.subr.bf16.mxu0 0
    %60 = vmatpush1.bf16.msra.mxu0 0
    %61 = vmatprep.subr.bf16.mxu0 0
    %62 = vmatpush1.bf16.msra.mxu0 0
    %63 = vmatprep.subr.bf16.mxu0 0
    %64 = vmatpush1.bf16.msra.mxu0 0
    %65 = vmatprep.subr.bf16.mxu0 0
    %66 = vmatpush1.bf16.msra.mxu0 0
    %67 = vmatprep.subr.bf16.mxu0 0
    %68 = vmatpush1.bf16.msra.mxu0 0
    %69 = vmatprep.subr.bf16.mxu0 0
    %70 = vmatpush1.bf16.msra.mxu0 0
    %71 = vmatprep.subr.bf16.mxu0 0
    %72 = vmatpush1.bf16.msra.mxu0 0
    %73 = vmatprep.mubr.bf16.mxu0 0
    %74 = vmatmul.mubr.bf16.gmra.mrb[0].mxu0 %v39
    %v75 = vpop.f32.mrb[0].mxu0
    %v76 = vadd.f32 %v35, %v75
    %v77 = vpop.f32.mrb[0].mxu0
    %v78 = vpop.f32.mrb[0].mxu0
    %v79 = vpop.f32.mrb[0].mxu0
    %80 = vdwg.mxu0
    %v81 = vmax.f32 %v76, 0.0
    %v82 = vpack.c.bf16 %v81, %v81
    %v83 = vld [vmem:[%s3] sm:$0xff]
    %v84 = vld [vmem:[%s3 + $0x8] sm:$0xff]
    %v85 = vld [vmem:[%s3 + $0x10] sm:$0xff]
    %v86 = vld [vmem:[%s3 + $0x18] sm:$0xff]
    %v87 = vld [vmem:[%s3 + $0x20] sm:$0xff]
    %v88 = vld [vmem:[%s3 + $0x28] sm:$0xff]
    %v89 = vld [vmem:[%s3 + $0x30] sm:$0xff]
    %v90 = vld [vmem:[%s3 + $0x38] sm:$0xff]
    %v91 = vpack.c.bf16 %v84, %v83
    %v92 = vpack.c.bf16 %v86, %v85
    %v93 = vpack.c.bf16 %v88, %v87
    %v94 = vpack.c.bf16 %v90, %v89
    %v95 = vld [vmem:[%s4] sm:$0x1]
    %v97 = vlaneseq
    %v98 = vshrl.u32 %v97, 7
    %v99 = vsub.s32 0, %v98
    %v100 = vrot.slane %v95, %v99
    %vm102 = vcmask 523264
    %v104 = vsel %vm102, %v82, 0
    %106 = vmatprep.subr.bf16.mxu0 0
    %107 = vmatpush1.bf16.msra.mxu0 %v91
    %108 = vmatprep.subr.bf16.mxu0 0
    %109 = vmatpush1.bf16.msra.mxu0 %v92
    %110 = vmatprep.subr.bf16.mxu0 0
    %111 = vmatpush1.bf16.msra.mxu0 %v93
    %112 = vmatprep.subr.bf16.mxu0 0
    %113 = vmatpush1.bf16.msra.mxu0 %v94
    %114 = vmatprep.subr.bf16.mxu0 0
    %115 = vmatpush1.bf16.msra.mxu0 0
    %116 = vmatprep.subr.bf16.mxu0 0
    %117 = vmatpush1.bf16.msra.mxu0 0
    %118 = vmatprep.subr.bf16.mxu0 0
    %119 = vmatpush1.bf16.msra.mxu0 0
    %120 = vmatprep.subr.bf16.mxu0 0
    %121 = vmatpush1.bf16.msra.mxu0 0
    %122 = vmatprep.subr.bf16.mxu0 0
    %123 = vmatpush1.bf16.msra.mxu0 0
    %124 = vmatprep.subr.bf16.mxu0 0
    %125 = vmatpush1.bf16.msra.mxu0 0
    %126 = vmatprep.subr.bf16.mxu0 0
    %127 = vmatpush1.bf16.msra.mxu0 0
    %128 = vmatprep.subr.bf16.mxu0 0
    %129 = vmatpush1.bf16.msra.mxu0 0
    %130 = vmatprep.subr.bf16.mxu0 0
    %131 = vmatpush1.bf16.msra.mxu0 0
    %132 = vmatprep.subr.bf16.mxu0 0
    %133 = vmatpush1.bf16.msra.mxu0 0
    %134 = vmatprep.subr.bf16.mxu0 0
    %135 = vmatpush1.bf16.msra.mxu0 0
    %136 = vmatprep.subr.bf16.mxu0 0
    %137 = vmatpush1.bf16.msra.mxu0 0
    %138 = vmatprep.mubr.bf16.mxu0 0
    %139 = vmatmul.mubr.bf16.gmra.mrb[0].mxu0 %v104
    %v140 = vpop.f32.mrb[0].mxu0
    %v141 = vadd.f32 %v100, %v140
    %v142 = vpop.f32.mrb[0].mxu0
    %v143 = vpop.f32.mrb[0].mxu0
    %v144 = vpop.f32.mrb[0].mxu0
    %145 = vdwg.mxu0
    %v146 = vmax.f32 %v141, 0.0
    %vm147 = vcmask 130048
    %148 = vst.msk [vmem:[#allocation2] sm:$0xff] %vm147, %v146
    // Predicated region
    $region22: #{extractor_forward.1} parent=1 // pred_check
      _
    $region23: #{extractor_forward.1} parent=1 // pred_check_branch
      %150 = sbr.rel (0) target = $region25
    $region24: #{extractor_forward.1} parent=1 // pred_region
      %s152 = ssub.s32 128, 128
      %153 = vsyncadd [#allocation3], %s152
      %s155 = sshll.u32 [#allocation2], 4
      %s156 = int_to_ptr.vmem [resolvable:$true] %s155
      %158 = dma.vmem_to_hbm [thread:$0]  %s156, 128, %s5, [#allocation3]
    $region25: #{extractor_forward.1} parent=1 // pred_fallthru
      _
    // Predicated region
    $region26: #{extractor_forward.1} parent=1 // pred_check
      _
    $region27: #{extractor_forward.1} parent=1 // pred_check_branch
      %160 = sbr.rel (0) target = $region29
    $region28: #{extractor_forward.1} parent=1 // pred_region
      %161 = dma.done [#allocation3], 128
    $region29: #{extractor_forward.1} parent=1 // pred_fallthru
      _
    %162 = vsyncpa [#allocation3], 1

</llo_original>
